<compile_context>
chip_gen: v7x
topology: tpu7x:2x2x1
jax: 0.10.0
libtpu: 0.0.40
codegen_flags: <defaults>
</compile_context>

<pallas_src>
import functools

import jax
import jax.numpy as jnp
from jax import lax
from jax.experimental import pallas as pl
from jax.experimental.pallas import tpu as pltpu


# ----------------------------------------------------------------------------
# Pallas kernel: sigmoid + score fusion + box decode, anchors on lanes
# ----------------------------------------------------------------------------
def _decode_kernel(head_ref, const_ref, boxes_ref, scores_ref, *, num_anchors):
    # head_ref:   (1, 5+C, TA)  raw logits (tx, ty, tw, th, obj, cls...)
    # const_ref:  (6, TA)       pre-folded anchor constants (see module docstring)
    # boxes_ref:  (1, 4, TA)    x1, y1, x2, y2
    # scores_ref: (1, C, TA)    class_conf * objectness
    ta = head_ref.shape[2]

    x = head_ref[0].astype(jnp.float32)                          # (5+C, TA)
    # logistic(x) == 0.5*tanh(0.5*x) + 0.5 : one EUP op/element (no exp+divide).
    p = 0.5 * jnp.tanh(0.5 * x) + 0.5

    scale_xy = const_ref[0:2, :]                                 # 2*stride
    bias_xy = const_ref[2:4, :]                                  # (grid-0.5)*stride
    scale_wh2 = const_ref[4:6, :]                                # 2*anchor_wh

    # YOLO decode (det_utils.BoxCoder.decode_single semantics):
    #   cxy  = (sig*2 - 0.5 + grid) * stride = sig*(2*stride) + (grid-0.5)*stride
    #   wh/2 = ((sig*2)^2 * anchor_wh) / 2   = sig*sig*(2*anchor_wh)
    xy = p[0:2, :] * scale_xy + bias_xy                          # (2, TA) centers
    s_wh = p[2:4, :]
    half = (s_wh * s_wh) * scale_wh2                             # (2, TA) half-extents

    x1y1 = xy - half
    x2y2 = xy + half
    # scores = class_conf * objectness (sublane broadcast of the obj row).
    scores = p[5:, :] * p[4:5, :]                                # (C, TA)

    if num_anchors % ta != 0:
        # Last anchor tile reads past the real array: mask padded lanes so they
        # can never pass the score threshold / corrupt max-coordinate math.
        lane = pl.program_id(0) * ta + lax.broadcasted_iota(jnp.int32, (1, ta), 1)
        valid = lane < num_anchors
        x1y1 = jnp.where(valid, x1y1, 0.0)
        x2y2 = jnp.where(valid, x2y2, 0.0)
        scores = jnp.where(valid, scores, -1.0)

    # cxcywh -> xyxy as two sublane-row stores (no lane-axis concatenate).
    boxes_ref[0, 0:2, :] = x1y1
    boxes_ref[0, 2:4, :] = x2y2
    scores_ref[0] = scores


def decode_and_score(head, grid, anchor_wh, stride, *, ta_max=4096):
    """Runs the Pallas kernel.

    Returns (boxes [B, 4, A_pad], scores [B, C, A_pad]) in the kernel-native,
    lane-dense layout.  Padded lanes (anchor >= A) carry boxes=0 / scores=-1.
    """
    B, A, F = head.shape
    C = F - 5

    # Anchor axis on lanes. Pick the biggest tile that fits comfortably in VMEM
    # (sweep ta_max per generation: ~8192 cap on v7x's 64 MiB, larger on v5e/v6e
    # with vmem_limit_bytes raised).
    a_pad128 = pl.cdiv(A, 128) * 128
    TA = min(ta_max, a_pad128)
    # v7x megacore: make sure both TensorCores get work when the problem allows.
    if B * pl.cdiv(a_pad128, TA) < 2 and TA > 128:
        TA = max(128, (a_pad128 // 2) // 128 * 128)
    A_pad = pl.cdiv(a_pad128, TA) * TA
    n_tiles = A_pad // TA

    # Single layout transpose (no cast, no pad) — dtype passes through, the
    # kernel upcasts.  Feeding bf16 from upstream halves this HBM read.
    # TODO(synk): ideally the detection head emits [B, 5+C, A] directly so even
    #             this transpose disappears.
    head_t = jnp.transpose(head, (0, 2, 1))                      # (B, F, A)

    grid_t = grid.astype(jnp.float32).T                          # (2, A)
    wh_t = anchor_wh.astype(jnp.float32).T                       # (2, A)
    st_t = stride.astype(jnp.float32).T                          # (2, A)
    consts = jnp.concatenate(
        [2.0 * st_t, (grid_t - 0.5) * st_t, 2.0 * wh_t], axis=0)  # (6, A)
    consts = jnp.pad(consts, ((0, 0), (0, A_pad - A)))            # tiny

    kernel = functools.partial(_decode_kernel, num_anchors=A)

    boxes_t, scores_t = pl.pallas_call(
        kernel,
        out_shape=(
            jax.ShapeDtypeStruct((B, 4, A_pad), jnp.float32),
            jax.ShapeDtypeStruct((B, C, A_pad), jnp.float32),
        ),
        # Batch innermost: consts block index (0, a) is unchanged across
        # consecutive steps, so Pallas skips re-fetching the consts tile.
        grid=(n_tiles, B),
        in_specs=[
            pl.BlockSpec((1, F, TA), lambda a, b: (b, 0, a)),
            pl.BlockSpec((6, TA), lambda a, b: (0, a)),
        ],
        out_specs=(
            pl.BlockSpec((1, 4, TA), lambda a, b: (b, 0, a)),
            pl.BlockSpec((1, C, TA), lambda a, b: (b, 0, a)),
        ),
        compiler_params=pltpu.CompilerParams(
            dimension_semantics=("parallel", "parallel")),
    )(head_t, consts)

    return boxes_t, scores_t


# ----------------------------------------------------------------------------
# Plain-JAX glue: top-k pre-filter + batched NMS + keep (fixed-size, padded)
# TODO(synk): torch.where / batched_nms produce dynamic shapes; implemented in
#             plain JAX with top-k pre-filtered, padded outputs + validity mask.
# ----------------------------------------------------------------------------
def _nms_keep_mask(boxes, valid, iou_thresh):
    """Greedy NMS on score-sorted boxes.

    The (k,k) IoU/suppression matrix is precomputed once (vectorized); the
    serial loop is just a row gather + AND per step."""
    k = boxes.shape[0]
    areas = (boxes[:, 2] - boxes[:, 0]) * (boxes[:, 3] - boxes[:, 1])
    x1 = jnp.maximum(boxes[:, None, 0], boxes[None, :, 0])
    y1 = jnp.maximum(boxes[:, None, 1], boxes[None, :, 1])
    x2 = jnp.minimum(boxes[:, None, 2], boxes[None, :, 2])
    y2 = jnp.minimum(boxes[:, None, 3], boxes[None, :, 3])
    inter = jnp.clip(x2 - x1, 0.0) * jnp.clip(y2 - y1, 0.0)
    iou = inter / (areas[:, None] + areas[None, :] - inter + 1e-9)
    idx = jnp.arange(k)
    # suppress[i, j]: higher-scored box i suppresses lower-scored box j.
    suppress = (iou > iou_thresh) & (idx[None, :] > idx[:, None])

    def body(i, keep):
        active = keep[i] & valid[i]
        return jnp.where(active, keep & ~suppress[i], keep)

    return lax.fori_loop(0, k, body, valid)


def postprocess_single(boxes_ca, scores_ca, *, score_thresh, nms_thresh,
                       detections_per_img, pre_nms_top_n):
    """boxes_ca: (4, A_pad), scores_ca: (C, A_pad). Returns padded detections."""
    C, A_pad = scores_ca.shape
    flat = scores_ca.reshape(-1)                   # j -> class j // A_pad, anchor j % A_pad
    masked = jnp.where(flat > score_thresh, flat, -1.0)   # safe: real scores in [0, 1]

    # Top-k pre-filter (torchvision-style) bounds the O(k^2) NMS.
    k = min(pre_nms_top_n, flat.shape[0])
    top_s, top_idx = lax.top_k(masked, k)          # descending by score
    anchor_idx = top_idx % A_pad
    labels = top_idx // A_pad
    v = top_s > score_thresh
    b = boxes_ca[:, anchor_idx].T                  # (k, 4) gather in native layout

    # batched_nms trick: offset boxes per class so different classes never overlap.
    max_coord = jnp.max(jnp.abs(boxes_ca)) + 1.0   # padded lanes are 0 -> harmless
    offset_boxes = b + (labels.astype(jnp.float32) * 2.0 * max_coord)[:, None]

    keep = _nms_keep_mask(offset_boxes, v, nms_thresh)

    # Kept entries first (score order preserved), truncate to detections_per_img.
    n_out = min(detections_per_img, k)
    order_key = jnp.where(keep, 0, 1) * k + jnp.arange(k)
    keep_order = jnp.argsort(order_key)[:n_out]
    return {
        "boxes": b[keep_order],
        "scores": top_s[keep_order],
        "labels": labels[keep_order],
        "valid": keep[keep_order],     # padding mask (True = real detection)
    }


def postprocess(head_outputs, anchors_tuple, score_thresh=0.3, nms_thresh=0.5,
                detections_per_img=10, pre_nms_top_n=256, image_shapes=None):
    grid, anchor_wh, stride = anchors_tuple

    @jax.jit
    def run(head, g, wh, st):
        boxes_t, scores_t = decode_and_score(head, g, wh, st)
        single = functools.partial(
            postprocess_single,
            score_thresh=score_thresh, nms_thresh=nms_thresh,
            detections_per_img=detections_per_img, pre_nms_top_n=pre_nms_top_n)
        return jax.vmap(single)(boxes_t, scores_t)  # one traced NMS, vmapped over B

    batched = run(head_outputs, grid, anchor_wh, stride)
    B = head_outputs.shape[0]
    return [{key: val[i] for key, val in batched.items()} for i in range(B)]


# ----------------------------------------------------------------------------
if __name__ == "__main__":
    key = jax.random.PRNGKey(0)
    B, A, C = 2, 128, 4                      # batch, anchors, classes
    F = 5 + C

    k1, k2 = jax.random.split(key)
    head_outputs = jax.random.normal(k1, (B, A, F), dtype=jnp.float32)

    # Deterministic synthetic anchors_tuple = (grid, anchor_wh, stride)
    gx = jnp.arange(A, dtype=jnp.float32) % 16
    gy = jnp.arange(A, dtype=jnp.float32) // 16
    grid = jnp.stack([gx, gy], axis=-1)                              # (A, 2)
    anchor_wh = 4.0 + 2.0 * jax.random.uniform(k2, (A, 2), dtype=jnp.float32)
    stride = jnp.full((A, 2), 8.0, dtype=jnp.float32)

    detections = postprocess(head_outputs, (grid, anchor_wh, stride),
                             score_thresh=0.3, nms_thresh=0.5,
                             detections_per_img=10)

    for det in detections:
        for v in det.values():
            jax.block_until_ready(v)

    print("KERNEL_OK")
</pallas_src>

<mosaic_0001>
module attributes {stable_mosaic.version = 11 : i64} {
  func.func @_decode_kernel(%arg0: i32, %arg1: i32, %arg2: memref<1x9x128xf32, #tpu.memory_space<vmem>>, %arg3: memref<6x128xf32, #tpu.memory_space<vmem>>, %arg4: memref<1x4x128xf32, #tpu.memory_space<vmem>>, %arg5: memref<1x4x128xf32, #tpu.memory_space<vmem>>) attributes {dimension_semantics = [#tpu.dimension_semantics<parallel>, #tpu.dimension_semantics<parallel>], iteration_bounds = array<i64: 1, 2>, scalar_prefetch = 0 : i64, scratch_operands = 0 : i64, tpu.core_type = #tpu.core_type<tc>, window_params = [{transform_indices = @transform_0, window_bounds = array<i64: 1, 9, 128>}, {transform_indices = @transform_1, window_bounds = array<i64: 6, 128>}, {transform_indices = @transform_2, window_bounds = array<i64: 1, 4, 128>}, {transform_indices = @transform_3, window_bounds = array<i64: 1, 4, 128>}]} {
    %c0 = arith.constant 0 : index
    %c0_0 = arith.constant 0 : index
    %c0_1 = arith.constant 0 : index
    %0 = vector.load %arg2[%c0, %c0_0, %c0_1] : memref<1x9x128xf32, #tpu.memory_space<vmem>>, vector<1x9x128xf32>
    %1 = vector.shape_cast %0 : vector<1x9x128xf32> to vector<9x128xf32>
    %cst = arith.constant 5.000000e-01 : f32
    %2 = vector.broadcast %cst : f32 to vector<9x128xf32>
    %3 = arith.mulf %2, %1 : vector<9x128xf32>
    %4 = math.tanh %3 : vector<9x128xf32>
    %cst_2 = arith.constant 5.000000e-01 : f32
    %5 = vector.broadcast %cst_2 : f32 to vector<9x128xf32>
    %6 = arith.mulf %5, %4 : vector<9x128xf32>
    %cst_3 = arith.constant 5.000000e-01 : f32
    %7 = vector.broadcast %cst_3 : f32 to vector<9x128xf32>
    %8 = arith.addf %6, %7 : vector<9x128xf32>
    %c0_4 = arith.constant 0 : index
    %c0_5 = arith.constant 0 : index
    %9 = vector.load %arg3[%c0_4, %c0_5] : memref<6x128xf32, #tpu.memory_space<vmem>>, vector<2x128xf32>
    %c2 = arith.constant 2 : index
    %c0_6 = arith.constant 0 : index
    %10 = vector.load %arg3[%c2, %c0_6] : memref<6x128xf32, #tpu.memory_space<vmem>>, vector<2x128xf32>
    %c4 = arith.constant 4 : index
    %c0_7 = arith.constant 0 : index
    %11 = vector.load %arg3[%c4, %c0_7] : memref<6x128xf32, #tpu.memory_space<vmem>>, vector<2x128xf32>
    %12 = vector.extract_strided_slice %8 {offsets = [0, 0], sizes = [2, 128], strides = [1, 1]} : vector<9x128xf32> to vector<2x128xf32>
    %13 = arith.mulf %12, %9 : vector<2x128xf32>
    %14 = arith.addf %13, %10 : vector<2x128xf32>
    %15 = vector.extract_strided_slice %8 {offsets = [2, 0], sizes = [2, 128], strides = [1, 1]} : vector<9x128xf32> to vector<2x128xf32>
    %16 = arith.mulf %15, %15 : vector<2x128xf32>
    %17 = arith.mulf %16, %11 : vector<2x128xf32>
    %18 = arith.subf %14, %17 : vector<2x128xf32>
    %19 = arith.addf %14, %17 : vector<2x128xf32>
    %20 = vector.extract_strided_slice %8 {offsets = [5, 0], sizes = [4, 128], strides = [1, 1]} : vector<9x128xf32> to vector<4x128xf32>
    %21 = vector.extract_strided_slice %8 {offsets = [4, 0], sizes = [1, 128], strides = [1, 1]} : vector<9x128xf32> to vector<1x128xf32>
    %22 = vector.broadcast %21 : vector<1x128xf32> to vector<4x128xf32>
    %23 = arith.mulf %20, %22 : vector<4x128xf32>
    %c0_8 = arith.constant 0 : index
    %c0_9 = arith.constant 0 : index
    %c0_10 = arith.constant 0 : index
    %24 = vector.load %arg4[%c0_8, %c0_9, %c0_10] : memref<1x4x128xf32, #tpu.memory_space<vmem>>, vector<1x2x128xf32>
    %25 = vector.shape_cast %24 : vector<1x2x128xf32> to vector<2x128xf32>
    %26 = vector.shape_cast %18 : vector<2x128xf32> to vector<1x2x128xf32>
    tpu.vector_store %arg4[%c0_8, %c0_9, %c0_10], %26 {strides = array<i32>} : memref<1x4x128xf32, #tpu.memory_space<vmem>>, vector<1x2x128xf32>,
    %c0_11 = arith.constant 0 : index
    %c2_12 = arith.constant 2 : index
    %c0_13 = arith.constant 0 : index
    %27 = vector.load %arg4[%c0_11, %c2_12, %c0_13] : memref<1x4x128xf32, #tpu.memory_space<vmem>>, vector<1x2x128xf32>
    %28 = vector.shape_cast %27 : vector<1x2x128xf32> to vector<2x128xf32>
    %29 = vector.shape_cast %19 : vector<2x128xf32> to vector<1x2x128xf32>
    tpu.vector_store %arg4[%c0_11, %c2_12, %c0_13], %29 {strides = array<i32>} : memref<1x4x128xf32, #tpu.memory_space<vmem>>, vector<1x2x128xf32>,
    %c0_14 = arith.constant 0 : index
    %c0_15 = arith.constant 0 : index
    %c0_16 = arith.constant 0 : index
    %30 = vector.load %arg5[%c0_14, %c0_15, %c0_16] : memref<1x4x128xf32, #tpu.memory_space<vmem>>, vector<1x4x128xf32>
    %31 = vector.shape_cast %30 : vector<1x4x128xf32> to vector<4x128xf32>
    %32 = vector.shape_cast %23 : vector<4x128xf32> to vector<1x4x128xf32>
    tpu.vector_store %arg5[%c0_14, %c0_15, %c0_16], %32 {strides = array<i32>} : memref<1x4x128xf32, #tpu.memory_space<vmem>>, vector<1x4x128xf32>,
    return
  }
  func.func @transform_0(%arg0: i32, %arg1: i32) -> (i32, i32, i32) {
    %c0_i32 = arith.constant 0 : i32
    %c0_i32_0 = arith.constant 0 : i32
    return %arg1, %c0_i32, %arg0 : i32, i32, i32
  }
  func.func @transform_1(%arg0: i32, %arg1: i32) -> (i32, i32) {
    %c0_i32 = arith.constant 0 : i32
    %c0_i32_0 = arith.constant 0 : i32
    return %c0_i32, %arg0 : i32, i32
  }
  func.func @transform_2(%arg0: i32, %arg1: i32) -> (i32, i32, i32) {
    %c0_i32 = arith.constant 0 : i32
    %c0_i32_0 = arith.constant 0 : i32
    return %arg1, %c0_i32, %arg0 : i32, i32, i32
  }
  func.func @transform_3(%arg0: i32, %arg1: i32) -> (i32, i32, i32) {
    %c0_i32 = arith.constant 0 : i32
    %c0_i32_0 = arith.constant 0 : i32
    return %arg1, %c0_i32, %arg0 : i32, i32, i32
  }
}

</mosaic_0001>

<llo_original>
// kernel: run.1
$region0: #{run.1}
  #allocation0 [shape = 'u32[]', space=smem, size = 0x4, offset = 0x4, fixed_abs, tag = 'smem constant byte address 0x4 - core index']
  #allocation1 [shape = 'u32[144,128]{1,0:T(1,128)}', space=vmem, size = 0x12000, scoped, tag = 'internal scratch']
  %s0 = inlined_call_operand.vmem [shape: f32[2,9,128], index: 0, kind: input, shape index: {}]
  %s1 = inlined_call_operand.vmem [shape: f32[6,128], index: 1, kind: input, shape index: {}]
  %s2 = inlined_call_operand.vmem [shape: f32[2,4,128], index: 2, kind: output, shape index: {0}]
  %s3 = inlined_call_operand.vmem [shape: f32[2,4,128], index: 3, kind: output, shape index: {1}]
  %4 = xla_tuple %s2, %s3
  %s5 = sld [smem:[#allocation0]]
  $region49: #{run.1} parent=0
    _
  %s7 = ssub.s32 1, %s5
  %s8 = scalar_select 0, %s7, %s5
  loop: start=0, step=1, limit=4
  $region2: #{run.1} parent=0 // loop_pre_header
    _
  $region3: #{run.1} parent=0 // loop_header
    %s10 = sphi 0, %s14
    %p11 = scmp.ge.s32.totalorder %s10, 4
    %s17 = sphi 0, %s29
    %s18 = sphi 0, %s25
    %s19 = sphi 0, %s17
    %s20 = sphi 0, %s18
    %s21 = sphi 0, %s19
    %s22 = sphi 0, %s20
    %s34 = sphi 0, %s36
    %s37 = sphi 0, %s34
    %s38 = sphi 0, %s37
    %s54 = sphi 0, %s38
    %s60 = sphi 0, %s62
    %s63 = sphi 0, %s60
    %s64 = sphi 0, %s63
    %s80 = sphi 0, %s64
    %s88 = sphi 0, %s90
    %s91 = sphi 0, %s88
    %s92 = sphi 0, %s91
    %s108 = sphi 0, %s92
    %s116 = sphi 0, %s118
    %s119 = sphi 0, %s116
    %s120 = sphi 0, %s119
    %s136 = sphi 0, %s120
  $region4: #{run.1} parent=0 // loop_header_branch
    %13 = sbr.rel (%p11) target = $region8
  $region5: #{run.1} parent=0 // loop_body
    %s15 = ssub.s32 %s10, 1
    %s16 = ssub.s32 %s10, 2
    %s23 = sadd.s32 1, %s18
    %p24 = scmp.ge.s32.totalorder %s23, 2
    %s25 = scalar_select %p24, 0, %s23
    %s26 = sadd.s32 1, %s17
    %s27 = scalar_select %p24, %s26, %s17
    %p28 = scmp.ge.s32.totalorder %s27, 1
    %s29 = scalar_select %p28, 0, %s27
    %s30 = ssub.s32 %s18, %s25
    %s31 = ssub.s32 %s17, %s29
    %s32 = sor.u32 %s30, %s31
    %p33 = scmp.eq.s32.totalorder %s32, 0
    %s35 = sadd.s32 %s34, 1
    %s36 = scalar_select %p33, %s34, %s35
    %p39 = pneg %p33
    %p40 = scmp.eq.s32.totalorder %s10, 1
    %p41 = por %p39, %p40
    %p42 = scmp.ne.s32.totalorder %s34, %s37
    %p43 = scmp.eq.s32.totalorder %s10, 0
    %p44 = por %p42, %p43
    %p45 = scmp.ne.s32.totalorder %s34, %s37
    %p46 = scmp.eq.s32.totalorder %s15, 1
    %p47 = por %p45, %p46
    %p48 = scmp.ne.s32.totalorder %s37, %s38
    %p49 = scmp.eq.s32.totalorder %s15, 0
    %p50 = por %p48, %p49
    %p51 = scmp.ne.s32.totalorder %s37, %s38
    %p52 = scmp.eq.s32.totalorder %s16, 1
    %p53 = por %p51, %p52
    %p55 = scmp.ne.s32.totalorder %s38, %s54
    %p56 = scmp.eq.s32.totalorder %s16, 0
    %p57 = por %p55, %p56
    %s58 = ssub.s32 %s17, %s29
    %p59 = scmp.eq.s32.totalorder %s58, 0
    %s61 = sadd.s32 %s60, 1
    %s62 = scalar_select %p59, %s60, %s61
    %p65 = pneg %p59
    %p66 = scmp.eq.s32.totalorder %s10, 1
    %p67 = por %p65, %p66
    %p68 = scmp.ne.s32.totalorder %s60, %s63
    %p69 = scmp.eq.s32.totalorder %s10, 0
    %p70 = por %p68, %p69
    %p71 = scmp.ne.s32.totalorder %s60, %s63
    %p72 = scmp.eq.s32.totalorder %s15, 1
    %p73 = por %p71, %p72
    %p74 = scmp.ne.s32.totalorder %s63, %s64
    %p75 = scmp.eq.s32.totalorder %s15, 0
    %p76 = por %p74, %p75
    %p77 = scmp.ne.s32.totalorder %s63, %s64
    %p78 = scmp.eq.s32.totalorder %s16, 1
    %p79 = por %p77, %p78
    %p81 = scmp.ne.s32.totalorder %s64, %s80
    %p82 = scmp.eq.s32.totalorder %s16, 0
    %p83 = por %p81, %p82
    %s84 = ssub.s32 %s18, %s25
    %s85 = ssub.s32 %s17, %s29
    %s86 = sor.u32 %s84, %s85
    %p87 = scmp.eq.s32.totalorder %s86, 0
    %s89 = sadd.s32 %s88, 1
    %s90 = scalar_select %p87, %s88, %s89
    %p93 = pneg %p87
    %p94 = scmp.eq.s32.totalorder %s10, 1
    %p95 = por %p93, %p94
    %p96 = scmp.ne.s32.totalorder %s88, %s91
    %p97 = scmp.eq.s32.totalorder %s10, 0
    %p98 = por %p96, %p97
    %p99 = scmp.ne.s32.totalorder %s88, %s91
    %p100 = scmp.eq.s32.totalorder %s15, 1
    %p101 = por %p99, %p100
    %p102 = scmp.ne.s32.totalorder %s91, %s92
    %p103 = scmp.eq.s32.totalorder %s15, 0
    %p104 = por %p102, %p103
    %p105 = scmp.ne.s32.totalorder %s91, %s92
    %p106 = scmp.eq.s32.totalorder %s16, 1
    %p107 = por %p105, %p106
    %p109 = scmp.ne.s32.totalorder %s92, %s108
    %p110 = scmp.eq.s32.totalorder %s16, 0
    %p111 = por %p109, %p110
    %s112 = ssub.s32 %s18, %s25
    %s113 = ssub.s32 %s17, %s29
    %s114 = sor.u32 %s112, %s113
    %p115 = scmp.eq.s32.totalorder %s114, 0
    %s117 = sadd.s32 %s116, 1
    %s118 = scalar_select %p115, %s116, %s117
    %p121 = pneg %p115
    %p122 = scmp.eq.s32.totalorder %s10, 1
    %p123 = por %p121, %p122
    %p124 = scmp.ne.s32.totalorder %s116, %s119
    %p125 = scmp.eq.s32.totalorder %s10, 0
    %p126 = por %p124, %p125
    %p127 = scmp.ne.s32.totalorder %s116, %s119
    %p128 = scmp.eq.s32.totalorder %s15, 1
    %p129 = por %p127, %p128
    %p130 = scmp.ne.s32.totalorder %s119, %s120
    %p131 = scmp.eq.s32.totalorder %s15, 0
    %p132 = por %p130, %p131
    %p133 = scmp.ne.s32.totalorder %s119, %s120
    %p134 = scmp.eq.s32.totalorder %s16, 1
    %p135 = por %p133, %p134
    %p137 = scmp.ne.s32.totalorder %s120, %s136
    %p138 = scmp.eq.s32.totalorder %s16, 0
    %p139 = por %p137, %p138
    %p140 = scmp.le.s32.totalorder 1, %s10
    %p141 = scmp.lt.s32.totalorder %s10, 3
    %p142 = pnand %p140, %p141
    %p143 = pneg %p142
    // Predicated region
    $region9: #{run.1} parent=5 // pred_check
      _
    $region10: #{run.1} parent=5 // pred_check_branch
      %145 = sbr.rel (%p142) target = $region12
    $region11: #{run.1} parent=5 // pred_region
      %s146 = ssub.s32 %s10, 1
      // Predicated region
      $region13: #{run.1} parent=11 // pred_check
        %p147 = pneg %p76
      $region14: #{run.1} parent=11 // pred_check_branch
        %149 = sbr.rel (%p147) target = $region16
      $region15: #{run.1} parent=11 // pred_region
        %p150 = scmp.lt.s32.totalorder %s19, 0
        %s151 = scalar_select %p150, %s19, 0
        %s152 = smul.addr %s151, 8
        %s153 = scalar_lea.vmem %s1, %s152
      $region16: #{run.1} parent=11 // pred_fallthru
        _
    $region12: #{run.1} parent=5 // pred_fallthru
      _
    %p154 = scmp.lt.s32.totalorder %s10, 2
    // Predicated region
    $region17: #{run.1} parent=5 // pred_check
      %p155 = pneg %p154
    $region18: #{run.1} parent=5 // pred_check_branch
      %157 = sbr.rel (%p155) target = $region20
    $region19: #{run.1} parent=5 // pred_region
      // Predicated region
      $region21: #{run.1} parent=19 // pred_check
        %p158 = pneg %p44
      $region22: #{run.1} parent=19 // pred_check_branch
        %160 = sbr.rel (%p158) target = $region24
      $region23: #{run.1} parent=19 // pred_region
        %p161 = scmp.lt.s32.totalorder %s18, 1
        %s162 = scalar_select %p161, %s18, 1
        %p163 = scmp.lt.s32.totalorder %s17, 0
        %s164 = scalar_select %p163, %s17, 0
        %s165 = smul.addr %s162, 2
        %s166 = sadd.s32 %s164, %s165
        %s167 = smul.addr %s166, 8
        %s168 = scalar_lea.vmem %s0, %s167
      $region24: #{run.1} parent=19 // pred_fallthru
        _
    $region20: #{run.1} parent=5 // pred_fallthru
      _
    %p169 = scmp.le.s32.totalorder 1, %s10
    %p170 = scmp.lt.s32.totalorder %s10, 3
    %p171 = pnand %p169, %p170
    %p172 = pneg %p171
    // Predicated region
    $region25: #{run.1} parent=5 // pred_check
      _
    $region26: #{run.1} parent=5 // pred_check_branch
      %174 = sbr.rel (%p171) target = $region28
    $region27: #{run.1} parent=5 // pred_region
      %s175 = ssub.s32 %s10, 1
      %p176 = scmp.lt.s32.totalorder %s20, 1
      %s177 = scalar_select %p176, %s20, 1
      %p178 = scmp.lt.s32.totalorder %s19, 0
      %s179 = scalar_select %p178, %s19, 0
      %s180 = smul.addr %s177, 2
      %s181 = sadd.s32 %s179, %s180
      %s182 = smul.addr %s181, 8
      %s183 = scalar_lea.vmem %s0, %s182
      %p184 = pneg %p50
      %p185 = pneg %p47
      %p186 = scmp.lt.s32.totalorder %s19, 0
      %s187 = scalar_select %p186, %s19, 0
      %s188 = smul.addr %s187, 8
      %s189 = scalar_lea.vmem %s1, %s188
      %p190 = pneg %p76
      %p191 = pneg %p73
      %p192 = pneg %p104
      %p193 = pneg %p101
      %p194 = scmp.lt.s32.totalorder %s20, 1
      %s195 = scalar_select %p194, %s20, 1
      %p196 = scmp.lt.s32.totalorder %s19, 0
      %s197 = scalar_select %p196, %s19, 0
      %s198 = sadd.s32 %s197, %s195
      %s199 = smul.addr %s198, 4
      %s200 = scalar_lea.vmem %s2, %s199
      %p201 = pneg %p132
      %p202 = pneg %p129
      %p203 = scmp.lt.s32.totalorder %s20, 1
      %s204 = scalar_select %p203, %s20, 1
      %p205 = scmp.lt.s32.totalorder %s19, 0
      %s206 = scalar_select %p205, %s19, 0
      %s207 = sadd.s32 %s206, %s204
      %s208 = smul.addr %s207, 4
      %s209 = scalar_lea.vmem %s3, %s208
      %p210 = scmp.lt.s32.totalorder %s20, 1
      %s211 = scalar_select %p210, %s20, 1
      %p212 = scmp.lt.s32.totalorder %s19, 0
      %s213 = scalar_select %p212, %s19, 0
      %s214 = smul.addr %s211, 2
      %s215 = sadd.s32 %s213, %s214
      %s216 = smul.addr %s215, 8
      %s217 = scalar_lea.vmem %s0, %s216
      %p218 = scmp.lt.s32.totalorder %s19, 0
      %s219 = scalar_select %p218, %s19, 0
      %s220 = smul.addr %s219, 8
      %s221 = scalar_lea.vmem %s1, %s220
      %p222 = scmp.lt.s32.totalorder %s20, 1
      %s223 = scalar_select %p222, %s20, 1
      %p224 = scmp.lt.s32.totalorder %s19, 0
      %s225 = scalar_select %p224, %s19, 0
      %s226 = sadd.s32 %s225, %s223
      %s227 = smul.addr %s226, 4
      %s228 = scalar_lea.vmem %s2, %s227
      %p229 = scmp.lt.s32.totalorder %s20, 1
      %s230 = scalar_select %p229, %s20, 1
      %p231 = scmp.lt.s32.totalorder %s19, 0
      %s232 = scalar_select %p231, %s19, 0
      %s233 = sadd.s32 %s232, %s230
      %s234 = smul.addr %s233, 4
      %s235 = scalar_lea.vmem %s3, %s234
      %v236 = vld [vmem:[%s217] sm:$0xff]
      %v237 = vld [vmem:[%s217 + $0x8] sm:$0x1]
      %v238 = vmul.f32 %v236, 0.5
      %v239 = vmul.f32 %v237, 0.5
      %v240 = vtanh.pop %v238
      %v241 = vtanh.pop %v239
      %v242 = vmul.f32 %v240, 0.5
      %v243 = vmul.f32 %v241, 0.5
      %v244 = vadd.f32 %v242, 0.5
      %v245 = vadd.f32 %v243, 0.5
      %v246 = vld [vmem:[%s221] sm:$0x3]
      %v247 = vld [vmem:[%s221 + $0x2] sm:$0x3]
      %v248 = vld [vmem:[%s221 + $0x4] sm:$0x3]
      %v249 = vmul.f32 %v244, %v246
      %v250 = vadd.f32 %v249, %v247
      %v251 = vmul.f32 %v244, %v244
      %v253 = vrot.slane %v248, 6
      %v255 = vmul.f32 %v251, %v253
      %v257 = vrot.slane %v255, 2
      %v259 = vsub.f32 %v250, %v257
      %v260 = vadd.f32 %v250, %v257
      %v261 = vlaneseq
      %v262 = vshrl.u32 %v261, 7
      %v263 = vsub.s32 4, %v262
      %v264 = vrot.slane %v244, %v263
      %v265 = vmul.f32 %v244, %v264
      %v266 = vmul.f32 %v245, %v264
      %267 = vst [vmem:[%s228] sm:$0x3] %v259
      %268 = vst [vmem:[%s228 + $0x2] sm:$0x3] %v260
      %269 = vst [vmem:[%s235 - $0x5] sm:$0xe0] %v265
      %270 = vst [vmem:[%s235 + $0x3] sm:$0x1] %v266
      %p271 = scmp.lt.s32.totalorder %s20, 1
      %s272 = scalar_select %p271, %s20, 1
      %p273 = scmp.lt.s32.totalorder %s19, 0
      %s274 = scalar_select %p273, %s19, 0
      %s275 = sadd.s32 %s274, %s272
      %s276 = smul.addr %s275, 4
      %s277 = scalar_lea.vmem %s2, %s276
      %p278 = scmp.lt.s32.totalorder %s20, 1
      %s279 = scalar_select %p278, %s20, 1
      %p280 = scmp.lt.s32.totalorder %s19, 0
      %s281 = scalar_select %p280, %s19, 0
      %s282 = sadd.s32 %s281, %s279
      %s283 = smul.addr %s282, 4
      %s284 = scalar_lea.vmem %s3, %s283
      // Predicated region
      $region29: #{run.1} parent=27 // pred_check
        %p285 = pneg %p101
      $region30: #{run.1} parent=27 // pred_check_branch
        %287 = sbr.rel (%p285) target = $region32
      $region31: #{run.1} parent=27 // pred_region
        _
      $region32: #{run.1} parent=27 // pred_fallthru
        _
      // Predicated region
      $region33: #{run.1} parent=27 // pred_check
        %p288 = pneg %p129
      $region34: #{run.1} parent=27 // pred_check_branch
        %290 = sbr.rel (%p288) target = $region36
      $region35: #{run.1} parent=27 // pred_region
        _
      $region36: #{run.1} parent=27 // pred_fallthru
        _
    $region28: #{run.1} parent=5 // pred_fallthru
      _
    %p291 = scmp.le.s32.totalorder 2, %s10
    // Predicated region
    $region37: #{run.1} parent=5 // pred_check
      %p292 = pneg %p291
    $region38: #{run.1} parent=5 // pred_check_branch
      %294 = sbr.rel (%p292) target = $region40
    $region39: #{run.1} parent=5 // pred_region
      %s295 = ssub.s32 %s10, 2
      // Predicated region
      $region41: #{run.1} parent=39 // pred_check
        %p296 = pneg %p107
      $region42: #{run.1} parent=39 // pred_check_branch
        %298 = sbr.rel (%p296) target = $region44
      $region43: #{run.1} parent=39 // pred_region
        %p299 = scmp.lt.s32.totalorder %s22, 1
        %s300 = scalar_select %p299, %s22, 1
        %p301 = scmp.lt.s32.totalorder %s21, 0
        %s302 = scalar_select %p301, %s21, 0
        %s303 = sadd.s32 %s302, %s300
        %s304 = smul.addr %s303, 4
        %s305 = scalar_lea.vmem %s2, %s304
      $region44: #{run.1} parent=39 // pred_fallthru
        _
      // Predicated region
      $region45: #{run.1} parent=39 // pred_check
        %p306 = pneg %p135
      $region46: #{run.1} parent=39 // pred_check_branch
        %308 = sbr.rel (%p306) target = $region48
      $region47: #{run.1} parent=39 // pred_region
        %p309 = scmp.lt.s32.totalorder %s22, 1
        %s310 = scalar_select %p309, %s22, 1
        %p311 = scmp.lt.s32.totalorder %s21, 0
        %s312 = scalar_select %p311, %s21, 0
        %s313 = sadd.s32 %s312, %s310
        %s314 = smul.addr %s313, 4
        %s315 = scalar_lea.vmem %s3, %s314
      $region48: #{run.1} parent=39 // pred_fallthru
        _
    $region40: #{run.1} parent=5 // pred_fallthru
      _
  $region6: #{run.1} parent=0 // loop_footer
    %s14 = sadd.s32 1, %s10
  $region7: #{run.1} parent=0 // loop_footer_branch
    %9 = sbr.rel target = $region3
  $region8: #{run.1} parent=0 // loop_exit
    _

</llo_original>
